<compile_context>
chip_gen: v7x
topology: tpu7x:2x2x1
jax: 0.10.0
libtpu: 0.0.40
codegen_flags: <defaults>
</compile_context>

<pallas_src>
import functools

import jax
import jax.numpy as jnp
from jax import lax
from jax.experimental import pallas as pl
from jax.experimental.pallas import tpu as pltpu


def _poisson_loss_sum_kernel(out_ref, tgt_ref, sum_ref, *, bias, rows,
                             tile_rows, blocks_per_split, needs_mask):
    """Accumulates per-lane-column sums of (output - target * log(output + bias))."""
    s = pl.program_id(0)   # TensorCore split (parallel)
    i = pl.program_id(1)   # row-block within split (arbitrary / reduction)

    @pl.when(i == 0)
    def _():
        sum_ref[...] = jnp.zeros_like(sum_ref)

    o = out_ref[...].astype(jnp.float32)
    t = tgt_ref[...].astype(jnp.float32)
    loss = o - t * jnp.log(o + jnp.float32(bias))

    if needs_mask:
        # Mask the ragged last tile and any fully-redundant (clamped) tile.
        row0 = (s * blocks_per_split + i) * tile_rows
        row_ids = row0 + lax.broadcasted_iota(jnp.int32, loss.shape, 0)
        loss = jnp.where(row_ids < rows, loss, 0.0)

    sum_ref[...] += jnp.sum(loss, axis=0, keepdims=True)[None]


def poisson_loss_3d(output, target, *, bias=1e-16, per_neuron=False,
                    tile_rows=1024):
    """Pallas implementation of PoissonLoss3d.forward."""
    B, T_out, N = output.shape
    lag = target.shape[1] - T_out

    # TODO(synk): the lag slice may force XLA to materialize a contiguous copy
    # of `target`; avoiding it entirely needs manual element-offset DMAs.
    tgt = target[:, lag:, :] if lag else target

    rows = B * T_out
    total = rows * N

    out2d = output.reshape(rows, N)
    tgt2d = tgt.reshape(rows, N)

    if (not per_neuron) and (N % 128 != 0) and (total % 128 == 0):
        # Lane-dense re-view for the scalar-mean mode (free reshape; every
        # vreg's 128 lanes carry useful data instead of N<128 of them).
        R, C = total // 128, 128
        out2d = out2d.reshape(R, C)
        tgt2d = tgt2d.reshape(R, C)
    else:
        R, C = rows, N

    # Row tile: as large as possible subject to ~32 MiB of double-buffered
    # input in VMEM (2 inputs x 2 pipeline buffers).
    itemsize = max(out2d.dtype.itemsize, tgt2d.dtype.itemsize)
    vmem_budget = 32 * 1024 * 1024
    max_rows = max(8, (vmem_budget // (C * itemsize * 2 * 2)) // 8 * 8)
    tr = min(tile_rows, max_rows)
    if R <= tr:
        tr = R                        # single block; full-dim block is allowed
    else:
        tr = max(8, (tr // 8) * 8)    # multiple of 8 (f32 sublane tiling)

    needed_blocks = pl.cdiv(R, tr)
    num_splits = 2 if needed_blocks >= 2 else 1   # 2 TCs on v7x; serial loop elsewhere
    blocks_per_split = pl.cdiv(needed_blocks, num_splits)
    needs_mask = (R % tr != 0) or (num_splits * blocks_per_split != needed_blocks)

    def in_map(s, i):
        gb = s * blocks_per_split + i
        # Clamp the (at most one) redundant trailing block; its contribution is
        # masked to zero inside the kernel.
        return (jnp.minimum(gb, needed_blocks - 1), 0)

    kernel = functools.partial(
        _poisson_loss_sum_kernel, bias=bias, rows=R, tile_rows=tr,
        blocks_per_split=blocks_per_split, needs_mask=needs_mask)

    bytes_accessed = (out2d.size * out2d.dtype.itemsize
                      + tgt2d.size * tgt2d.dtype.itemsize
                      + num_splits * C * 4)

    partial_sums = pl.pallas_call(
        kernel,
        out_shape=jax.ShapeDtypeStruct((num_splits, 1, C), jnp.float32),
        grid_spec=pltpu.PrefetchScalarGridSpec(
            num_scalar_prefetch=0,
            grid=(num_splits, blocks_per_split),
            in_specs=[
                pl.BlockSpec((tr, C), in_map),
                pl.BlockSpec((tr, C), in_map),
            ],
            out_specs=pl.BlockSpec((1, 1, C), lambda s, i: (s, 0, 0)),
        ),
        compiler_params=pltpu.CompilerParams(
            dimension_semantics=("parallel", "arbitrary"),
            vmem_limit_bytes=48 * 1024 * 1024),
        cost_estimate=pl.CostEstimate(
            flops=4 * R * C,
            transcendentals=R * C,
            bytes_accessed=bytes_accessed),
    )(out2d, tgt2d)

    per_col_sum = jnp.sum(partial_sums, axis=(0, 1))     # (C,)

    if per_neuron:
        return per_col_sum / jnp.float32(rows)            # mean over B*T_out, per neuron
    return jnp.sum(per_col_sum) / jnp.float32(total)      # global mean


def _reference(output, target, bias, per_neuron):
    lag = target.shape[1] - output.shape[1]
    loss = output - target[:, lag:, :] * jnp.log(output + bias)
    if per_neuron:
        return jnp.mean(loss.reshape(-1, loss.shape[-1]), axis=0)
    return jnp.mean(loss)


if __name__ == "__main__":
    key = jax.random.PRNGKey(0)
    k1, k2, k3, k4 = jax.random.split(key, 4)

    ok = True

    # --- Test 1: small shapes, default (large) tile -> single block path. ---
    B, T_out, T_tgt, N = 2, 8, 10, 32   # lag = 2
    output = jax.nn.softplus(jax.random.normal(k1, (B, T_out, N), jnp.float32)) + 0.1
    target = jnp.floor(jnp.abs(jax.random.normal(k2, (B, T_tgt, N), jnp.float32)) * 3.0)

    for pn in (False, True):
        got = jax.block_until_ready(poisson_loss_3d(output, target, bias=1e-16,
                                                    per_neuron=pn))
        ref = _reference(output, target, 1e-16, pn)
        ok &= bool(jnp.allclose(got, ref, rtol=1e-5, atol=1e-5))

    # --- Test 2: ragged rows + tiny tile -> exercises masking, block clamping
    #     and the 2-way TensorCore split. ---
    B, T_out, T_tgt, N = 3, 50, 53, 33  # lag = 3, rows = 150 (not a multiple of 8)
    output = jax.nn.softplus(jax.random.normal(k3, (B, T_out, N), jnp.float32)) + 0.1
    target = jnp.floor(jnp.abs(jax.random.normal(k4, (B, T_tgt, N), jnp.float32)) * 3.0)

    for pn in (False, True):
        got = jax.block_until_ready(poisson_loss_3d(output, target, bias=1e-16,
                                                    per_neuron=pn, tile_rows=8))
        ref = _reference(output, target, 1e-16, pn)
        ok &= bool(jnp.allclose(got, ref, rtol=1e-5, atol=1e-5))

    assert ok, "Pallas PoissonLoss3d does not match reference"
    print("KERNEL_OK")
</pallas_src>

<mosaic_0001>
module attributes {stable_mosaic.version = 11 : i64} {
  func.func @_poisson_loss_sum_kernel(%arg0: i32, %arg1: i32, %arg2: memref<4x128xf32, #tpu.memory_space<vmem>>, %arg3: memref<4x128xf32, #tpu.memory_space<vmem>>, %arg4: memref<1x1x128xf32, #tpu.memory_space<vmem>>) attributes {dimension_semantics = [#tpu.dimension_semantics<parallel>, #tpu.dimension_semantics<arbitrary>], iteration_bounds = array<i64: 1, 1>, scalar_prefetch = 0 : i64, scratch_operands = 0 : i64, tpu.core_type = #tpu.core_type<tc>, window_params = [{transform_indices = @transform_0, window_bounds = array<i64: 4, 128>}, {transform_indices = @transform_1, window_bounds = array<i64: 4, 128>}, {transform_indices = @transform_2, window_bounds = array<i64: 1, 1, 128>}]} {
    %c0_i32 = arith.constant 0 : i32
    %0 = arith.cmpi eq, %arg1, %c0_i32 : i32
    %1 = arith.extui %0 : i1 to i32
    %c0_i32_0 = arith.constant 0 : i32
    %2 = arith.cmpi ne, %1, %c0_i32_0 : i32
    scf.if %2 {
      %cst_11 = arith.constant 0.000000e+00 : f32
      %16 = vector.broadcast %cst_11 : f32 to vector<1x1x128xf32>
      %c0_12 = arith.constant 0 : index
      %c0_13 = arith.constant 0 : index
      %c0_14 = arith.constant 0 : index
      %17 = vector.load %arg4[%c0_12, %c0_13, %c0_14] : memref<1x1x128xf32, #tpu.memory_space<vmem>>, vector<1x1x128xf32>
      tpu.vector_store %arg4[%c0_12, %c0_13, %c0_14], %16 {strides = array<i32>} : memref<1x1x128xf32, #tpu.memory_space<vmem>>, vector<1x1x128xf32>,
    } else {
    }
    %c0 = arith.constant 0 : index
    %c0_1 = arith.constant 0 : index
    %3 = vector.load %arg2[%c0, %c0_1] : memref<4x128xf32, #tpu.memory_space<vmem>>, vector<4x128xf32>
    %c0_2 = arith.constant 0 : index
    %c0_3 = arith.constant 0 : index
    %4 = vector.load %arg3[%c0_2, %c0_3] : memref<4x128xf32, #tpu.memory_space<vmem>>, vector<4x128xf32>
    %cst = arith.constant 1.000000e-16 : f32
    %5 = vector.broadcast %cst : f32 to vector<4x128xf32>
    %6 = arith.addf %3, %5 : vector<4x128xf32>
    %7 = math.log %6 : vector<4x128xf32>
    %8 = arith.mulf %4, %7 : vector<4x128xf32>
    %9 = arith.subf %3, %8 : vector<4x128xf32>
    %c0_4 = arith.constant 0 : index
    %c0_5 = arith.constant 0 : index
    %c0_6 = arith.constant 0 : index
    %10 = vector.load %arg4[%c0_4, %c0_5, %c0_6] : memref<1x1x128xf32, #tpu.memory_space<vmem>>, vector<1x1x128xf32>
    %cst_7 = arith.constant dense<0.000000e+00> : vector<128xf32>
    %11 = vector.multi_reduction <add>, %9, %cst_7 [0] : vector<4x128xf32> to vector<128xf32>
    %12 = vector.shape_cast %11 : vector<128xf32> to vector<1x128xf32>
    %13 = vector.shape_cast %12 : vector<1x128xf32> to vector<1x1x128xf32>
    %14 = arith.addf %10, %13 : vector<1x1x128xf32>
    %c0_8 = arith.constant 0 : index
    %c0_9 = arith.constant 0 : index
    %c0_10 = arith.constant 0 : index
    %15 = vector.load %arg4[%c0_8, %c0_9, %c0_10] : memref<1x1x128xf32, #tpu.memory_space<vmem>>, vector<1x1x128xf32>
    tpu.vector_store %arg4[%c0_8, %c0_9, %c0_10], %14 {strides = array<i32>} : memref<1x1x128xf32, #tpu.memory_space<vmem>>, vector<1x1x128xf32>,
    return
  }
  func.func @transform_0(%arg0: i32, %arg1: i32) -> (i32, i32) {
    %c1_i32 = arith.constant 1 : i32
    %0 = arith.muli %arg0, %c1_i32 : i32
    %1 = arith.addi %0, %arg1 : i32
    %c0_i32 = arith.constant 0 : i32
    %2 = arith.minsi %1, %c0_i32 : i32
    %c0_i32_0 = arith.constant 0 : i32
    %c0_i32_1 = arith.constant 0 : i32
    return %2, %c0_i32_0 : i32, i32
  }
  func.func @transform_1(%arg0: i32, %arg1: i32) -> (i32, i32) {
    %c1_i32 = arith.constant 1 : i32
    %0 = arith.muli %arg0, %c1_i32 : i32
    %1 = arith.addi %0, %arg1 : i32
    %c0_i32 = arith.constant 0 : i32
    %2 = arith.minsi %1, %c0_i32 : i32
    %c0_i32_0 = arith.constant 0 : i32
    %c0_i32_1 = arith.constant 0 : i32
    return %2, %c0_i32_0 : i32, i32
  }
  func.func @transform_2(%arg0: i32, %arg1: i32) -> (i32, i32, i32) {
    %c0_i32 = arith.constant 0 : i32
    %c0_i32_0 = arith.constant 0 : i32
    %c0_i32_1 = arith.constant 0 : i32
    return %arg0, %c0_i32, %c0_i32_0 : i32, i32, i32
  }
}

</mosaic_0001>

<llo_original>
// kernel: tpu_custom_call.1
$region0: #{tpu_custom_call.1}
  #allocation0 [shape = 'u32[]', space=smem, size = 0x4, offset = 0x4, fixed_abs, tag = 'smem constant byte address 0x4 - core index']
  #allocation1 [shape = 'u32[144,128]{1,0:T(1,128)}', space=vmem, size = 0x12000, scoped, tag = 'internal scratch']
  %s0 = inlined_call_operand.hbm [shape: f32[4,128], index: 0, kind: input, shape index: {}]
  %s1 = inlined_call_operand.hbm [shape: f32[4,128], index: 1, kind: input, shape index: {}]
  %s2 = inlined_call_operand.hbm [shape: f32[1,1,128], index: 2, kind: output, shape index: {}]
  %s3 = sld [smem:[#allocation0]]
  $region30: #{tpu_custom_call.1} parent=0
    _
  %s5 = ssub.s32 1, %s3
  %s6 = scalar_select 0, %s5, %s3
  $region1: #{tpu_custom_call.1} parent=0
    #allocation2 [shape = 'u8[2048]{0}', space=vmem, size = 0x800, scoped, tag = 'input window, operand 0, single buffered']
    #allocation3 [shape = 's32[1]{0}', space=sflag, size = 0x4, scoped, tag = 'scoped memory for tpu_custom_call.1']
    #allocation4 [shape = 's32[1]{0}', space=sflag, size = 0x4, scoped, tag = 'scoped memory for tpu_custom_call.1']
    #allocation5 [shape = 'u8[2048]{0}', space=vmem, size = 0x800, scoped, tag = 'input window, operand 1, single buffered']
    #allocation6 [shape = 's32[1]{0}', space=sflag, size = 0x4, scoped, tag = 'scoped memory for tpu_custom_call.1']
    #allocation7 [shape = 'u8[512]{0}', space=vmem, size = 0x400, scoped, tag = 'output window, operand 0, single buffered']
    %7 = vsyncpa [#allocation3], 0
    %8 = vsyncpa [#allocation6], 0
    %9 = vsyncpa [#allocation4], 0
    // Predicated region
    $region2: #{tpu_custom_call.1} parent=1 // pred_check
      _
    $region3: #{tpu_custom_call.1} parent=1 // pred_check_branch
      %11 = sbr.rel (0) target = $region5
    $region4: #{tpu_custom_call.1} parent=1 // pred_region
      %s12 = sadd.s32 0, 0
      %p13 = scmp.lt.s32.totalorder %s12, 0
      %s14 = scalar_select %p13, %s12, 0
      %s16 = ssub.s32 64, 64
      %17 = vsyncadd [#allocation3], %s16
      %s18 = smul.addr %s14, 64
      %s19 = scalar_lea.hbm %s0, %s18
      %s21 = sshll.u32 [#allocation2], 4
      %s22 = int_to_ptr.vmem [resolvable:$true] %s21
      %24 = dma.hbm_to_vmem [thread:$0]  %s19, 64, %s22, [#allocation3]
    $region5: #{tpu_custom_call.1} parent=1 // pred_fallthru
      _
    // Predicated region
    $region6: #{tpu_custom_call.1} parent=1 // pred_check
      _
    $region7: #{tpu_custom_call.1} parent=1 // pred_check_branch
      %26 = sbr.rel (0) target = $region9
    $region8: #{tpu_custom_call.1} parent=1 // pred_region
      %s27 = sadd.s32 0, 0
      %p28 = scmp.lt.s32.totalorder %s27, 0
      %s29 = scalar_select %p28, %s27, 0
      %s31 = ssub.s32 64, 64
      %32 = vsyncadd [#allocation6], %s31
      %s33 = smul.addr %s29, 64
      %s34 = scalar_lea.hbm %s1, %s33
      %s36 = sshll.u32 [#allocation5], 4
      %s37 = int_to_ptr.vmem [resolvable:$true] %s36
      %39 = dma.hbm_to_vmem [thread:$0]  %s34, 64, %s37, [#allocation6]
    $region9: #{tpu_custom_call.1} parent=1 // pred_fallthru
      _
    // Predicated region
    $region10: #{tpu_custom_call.1} parent=1 // pred_check
      _
    $region11: #{tpu_custom_call.1} parent=1 // pred_check_branch
      %41 = sbr.rel (0) target = $region13
    $region12: #{tpu_custom_call.1} parent=1 // pred_region
      %42 = dma.done [#allocation3], 64
    $region13: #{tpu_custom_call.1} parent=1 // pred_fallthru
      _
    // Predicated region
    $region14: #{tpu_custom_call.1} parent=1 // pred_check
      _
    $region15: #{tpu_custom_call.1} parent=1 // pred_check_branch
      %44 = sbr.rel (0) target = $region17
    $region16: #{tpu_custom_call.1} parent=1 // pred_region
      %45 = dma.done [#allocation6], 64
    $region17: #{tpu_custom_call.1} parent=1 // pred_fallthru
      _
    %s46 = sadd.s32 0, 0
    %p47 = scmp.lt.s32.totalorder %s46, 0
    %s48 = scalar_select %p47, %s46, 0
    %s49 = sadd.s32 0, 0
    %p50 = scmp.lt.s32.totalorder %s49, 0
    %s51 = scalar_select %p50, %s49, 0
    %p52 = scmp.eq.s32.totalorder 0, 0
    // Predicated region
    $region18: #{tpu_custom_call.1} parent=1 // pred_check
      %p53 = pneg %p52
    $region19: #{tpu_custom_call.1} parent=1 // pred_check_branch
      %55 = sbr.rel (%p53) target = $region21
    $region20: #{tpu_custom_call.1} parent=1 // pred_region
      %56 = vst [vmem:[#allocation7] sm:$0x1] 0.0
    $region21: #{tpu_custom_call.1} parent=1 // pred_fallthru
      _
    %v57 = vld [vmem:[#allocation2] sm:$0xf]
    %v58 = vld [vmem:[#allocation5] sm:$0xf]
    %v59 = vadd.f32 %v57, 1e-16
    %v60 = vlog2.pop %v59
    %v61 = vmul.f32 %v60, 0.6931472
    %v62 = vmul.f32 %v58, %v61
    %v63 = vsub.f32 %v57, %v62
    %v64 = vld [vmem:[#allocation7] sm:$0x1]
    %vm65 = vcmask 1043456
    %v66 = vsel %vm65, %v63, 0.0
    %v67 = vrot.slane %v66, 4
    %v68 = vadd.f32 %v66, %v67
    %v69 = vrot.slane %v68, 2
    %v70 = vadd.f32 %v68, %v69
    %v71 = vrot.slane %v70, 1
    %v72 = vadd.f32 %v70, %v71
    %v73 = vadd.f32 %v64, %v72
    %74 = vst [vmem:[#allocation7] sm:$0x1] %v73
    // Predicated region
    $region22: #{tpu_custom_call.1} parent=1 // pred_check
      _
    $region23: #{tpu_custom_call.1} parent=1 // pred_check_branch
      %76 = sbr.rel (0) target = $region25
    $region24: #{tpu_custom_call.1} parent=1 // pred_region
      %s78 = ssub.s32 16, 16
      %79 = vsyncadd [#allocation4], %s78
      %s81 = sshll.u32 [#allocation7], 4
      %s82 = int_to_ptr.vmem [resolvable:$true] %s81
      %84 = dma.vmem_to_hbm [thread:$0]  %s82, 16, %s2, [#allocation4]
    $region25: #{tpu_custom_call.1} parent=1 // pred_fallthru
      _
    // Predicated region
    $region26: #{tpu_custom_call.1} parent=1 // pred_check
      _
    $region27: #{tpu_custom_call.1} parent=1 // pred_check_branch
      %86 = sbr.rel (0) target = $region29
    $region28: #{tpu_custom_call.1} parent=1 // pred_region
      %87 = dma.done [#allocation4], 16
    $region29: #{tpu_custom_call.1} parent=1 // pred_fallthru
      _
    %88 = vsyncpa [#allocation3], 1
    %89 = vsyncpa [#allocation6], 1
    %90 = vsyncpa [#allocation4], 1

</llo_original>
